<compile_context>
chip_gen: v6e
topology: v6e:2x2x1
jax: 0.10.0
libtpu: 0.0.40
codegen_flags: <defaults>
</compile_context>

<pallas_src>
import functools

import jax
import jax.numpy as jnp
from jax import lax
from jax.experimental import pallas as pl
from jax.experimental.pallas import tpu as pltpu


def _round_up(x, m):
    return ((x + m - 1) // m) * m


def _sublane(dtype):
    # Native sublane packing: f32 -> 8, bf16 -> 16, int8/fp8 -> 32.
    return 8 * (4 // jnp.dtype(dtype).itemsize)


def _tpu_generation():
    try:
        kind = jax.devices()[0].device_kind.lower()
    except Exception:
        return 6
    for g in (7, 6, 5):
        if f"v{g}" in kind:
            return g
    return 6


# Per-generation tile caps (assuming bf16 compute).  Arithmetic intensity
# tm*tn/(tm+tn) vs crossover:  v5e 341 (>~240), v6e 682 (>~650), v7x 410 (>~310).
_TILE_CAPS = {
    5: dict(tm=512, tn=1024, tk=1024, vmem_cap=100 << 20),
    6: dict(tm=1024, tn=2048, tk=1024, vmem_cap=100 << 20),
    7: dict(tm=512, tn=2048, tk=1024, vmem_cap=48 << 20),
}


def _pick_tile(dim, gran, cap):
    """Largest tile <= cap (multiple of gran); prefer one that divides the
    gran-rounded dim so no padding copy of the operand is needed."""
    dim_r = _round_up(dim, gran)
    cap = max(_round_up(cap, gran), gran)
    if dim_r <= cap:
        return dim_r
    t = cap
    while t >= gran:
        if dim_r % t == 0:
            if 2 * t >= cap:  # accept only reasonably large divisors
                return t
            break
        t -= gran
    return cap  # fall back to cap (padding will be applied)


def _dot_nt(x_tile, w_tile):
    # x_tile: (tm, tk), w_tile: (tn, tk) -> (tm, tn), contracting K of both.
    # W keeps its PyTorch (out_dim, in_dim) layout; no HBM transpose pass.
    return lax.dot_general(
        x_tile,
        w_tile,
        dimension_numbers=(((1,), (1,)), ((), ())),
        preferred_element_type=jnp.float32,
    )


def _kernel_f32_out(x_ref, w_ref, o_ref):
    """f32 output: accumulate directly in the (resident-over-k) output block."""
    @pl.when(pl.program_id(2) == 0)
    def _():
        o_ref[...] = jnp.zeros_like(o_ref)

    o_ref[...] += _dot_nt(x_ref[...], w_ref[...])


def _kernel_scratch(x_ref, w_ref, o_ref, acc_ref):
    """Narrow output dtype: accumulate in f32 scratch, cast once at the end."""
    k = pl.program_id(2)

    @pl.when(k == 0)
    def _():
        acc_ref[...] = jnp.zeros_like(acc_ref)

    acc_ref[...] += _dot_nt(x_ref[...], w_ref[...])

    @pl.when(k == pl.num_programs(2) - 1)
    def _():
        o_ref[...] = acc_ref[...].astype(o_ref.dtype)


@functools.partial(
    jax.jit, static_argnames=("tm", "tn", "tk", "compute_dtype", "vmem_cap")
)
def _linear_impl(x, w, *, tm, tn, tk, compute_dtype, vmem_cap):
    M, K = x.shape
    N, _ = w.shape
    out_dtype = x.dtype

    if x.dtype != compute_dtype:
        x = x.astype(compute_dtype)
    if w.dtype != compute_dtype:
        w = w.astype(compute_dtype)

    # Zero-pad to exact tile multiples (zero K padding is exact for the
    # accumulation; M/N padding is sliced off the output).  Divisor-friendly
    # tile selection above avoids this copy for aligned shapes.
    Mp, Np, Kp = _round_up(M, tm), _round_up(N, tn), _round_up(K, tk)
    if (Mp, Kp) != (M, K):
        x = jnp.pad(x, ((0, Mp - M), (0, Kp - K)))
    if (Np, Kp) != (N, K):
        w = jnp.pad(w, ((0, Np - N), (0, Kp - K)))

    grid = (Mp // tm, Np // tn, Kp // tk)

    in_bytes = jnp.dtype(compute_dtype).itemsize
    out_bytes = jnp.dtype(out_dtype).itemsize
    acc_in_out = out_dtype == jnp.float32

    # VMEM budget: double-buffered x/w tiles + double-buffered out tile
    # (+ f32 accumulator when needed), with headroom; clamped per generation.
    vmem_est = 2 * (tm * tk + tn * tk) * in_bytes + 2 * tm * tn * out_bytes
    if not acc_in_out:
        vmem_est += tm * tn * 4
    vmem_limit = min(max(int(1.25 * vmem_est) + (4 << 20), 32 << 20), vmem_cap)

    # Actual streamed HBM traffic: x re-read per N tile, W re-read per M tile.
    cost = pl.CostEstimate(
        flops=2 * Mp * Np * Kp,
        transcendentals=0,
        bytes_accessed=(Mp * Kp * grid[1] + Np * Kp * grid[0]) * in_bytes
        + Mp * Np * out_bytes,
    )

    x_spec = pl.BlockSpec((tm, tk), lambda i, j, k: (i, k))
    w_spec = pl.BlockSpec((tn, tk), lambda i, j, k: (j, k))  # W stays (N, K)
    o_spec = pl.BlockSpec((tm, tn), lambda i, j, k: (i, j))

    if acc_in_out:
        kernel, scratch = _kernel_f32_out, ()
    else:
        kernel, scratch = _kernel_scratch, (pltpu.VMEM((tm, tn), jnp.float32),)

    out = pl.pallas_call(
        kernel,
        out_shape=jax.ShapeDtypeStruct((Mp, Np), out_dtype),
        grid_spec=pltpu.PrefetchScalarGridSpec(
            num_scalar_prefetch=0,
            grid=grid,
            in_specs=[x_spec, w_spec],
            out_specs=o_spec,
            scratch_shapes=scratch,
        ),
        compiler_params=pltpu.CompilerParams(
            dimension_semantics=("parallel", "parallel", "arbitrary"),
            vmem_limit_bytes=vmem_limit,
        ),
        cost_estimate=cost,
    )(x, w)

    if (Mp, Np) != (M, N):
        out = out[:M, :N]
    return out


def linear_layer(x, w, *, tm=None, tn=None, tk=None, compute_dtype=None):
    """y = x @ w.T with w of shape (out_dim, in_dim), no bias (PyTorch Linear).

    compute_dtype=None (auto) uses bf16 MXU compute with f32 accumulation when
    the inputs are f32; pass jnp.float32 to force exact f32 matmul numerics.
    """
    M, K = x.shape
    N, K2 = w.shape
    assert K == K2, "in_dim mismatch"

    if compute_dtype is None:
        compute_dtype = jnp.bfloat16 if x.dtype == jnp.float32 else x.dtype
    compute_dtype = jnp.dtype(compute_dtype)

    gen = _tpu_generation()
    caps = _TILE_CAPS.get(gen, _TILE_CAPS[6])
    sub = _sublane(compute_dtype)

    if tm is None:
        Mr = _round_up(M, sub)
        # Small-batch fast path: a single i block means every weight element is
        # DMA'd from HBM exactly once (weight-bandwidth-bound optimum).
        tm = Mr if Mr <= 512 else _pick_tile(M, sub, caps["tm"])
    if tn is None:
        tn = _pick_tile(N, 128, caps["tn"])
    if tk is None:
        tk = _pick_tile(K, 128, caps["tk"])

    # Enforce hardware granularity even for caller-provided tiles.
    tm = _round_up(tm, sub)
    tn = _round_up(tn, 128)
    tk = _round_up(tk, 128)

    # v7x has 2 TensorCores per chip: make sure the parallel (i, j) grid has
    # at least 2 tiles so both cores get work.
    if gen == 7 and (_round_up(M, tm) // tm) * (_round_up(N, tn) // tn) < 2:
        if _round_up(N, 128) >= 256:
            tn = _round_up((_round_up(N, 128) + 1) // 2, 128)

    return _linear_impl(
        x,
        w,
        tm=int(tm),
        tn=int(tn),
        tk=int(tk),
        compute_dtype=compute_dtype,
        vmem_cap=int(caps["vmem_cap"]),
    )


if __name__ == "__main__":
    # LinearLayer(in_dim, out_dim) -> fc.weight shape (out_dim, in_dim)
    batch, in_dim, out_dim = 8, 32, 64

    key = jax.random.PRNGKey(0)
    kx, kw = jax.random.split(key)

    x = jax.random.normal(kx, (batch, in_dim), dtype=jnp.float32)
    # Deterministic init mimicking nn.Linear's uniform(-1/sqrt(in_dim), 1/sqrt(in_dim))
    bound = 1.0 / jnp.sqrt(jnp.float32(in_dim))
    w = jax.random.uniform(
        kw, (out_dim, in_dim), dtype=jnp.float32, minval=-bound, maxval=bound
    )

    y_ref = x @ w.T

    # Default path: bf16 MXU compute, f32 accumulation, f32 output.
    y = jax.block_until_ready(linear_layer(x, w))
    assert y.shape == (batch, out_dim)
    assert y.dtype == jnp.float32
    assert jnp.allclose(y, y_ref, atol=3e-2, rtol=3e-2), "bf16-compute mismatch"

    # Explicit f32 compute (opt-out of bf16): exact numerics.
    y32 = jax.block_until_ready(linear_layer(x, w, compute_dtype=jnp.float32))
    assert jnp.allclose(y32, y_ref, atol=1e-5, rtol=1e-5), "f32 path mismatch"

    # bf16 inputs exercise the scratch-accumulator (narrow-output) path.
    y_bf16 = jax.block_until_ready(
        linear_layer(x.astype(jnp.bfloat16), w.astype(jnp.bfloat16))
    )
    assert y_bf16.shape == (batch, out_dim)
    assert y_bf16.dtype == jnp.bfloat16
    assert jnp.allclose(
        y_bf16.astype(jnp.float32), y_ref, atol=3e-2, rtol=3e-2
    ), "bf16 I/O path mismatch vs reference"

    print("KERNEL_OK")
</pallas_src>

<mosaic_0001>
module attributes {stable_mosaic.version = 11 : i64} {
  func.func @_kernel_f32_out(%arg0: i32, %arg1: i32, %arg2: i32, %arg3: memref<16x128xbf16, #tpu.memory_space<vmem>>, %arg4: memref<128x128xbf16, #tpu.memory_space<vmem>>, %arg5: memref<16x128xf32, #tpu.memory_space<vmem>>) attributes {dimension_semantics = [#tpu.dimension_semantics<parallel>, #tpu.dimension_semantics<parallel>, #tpu.dimension_semantics<arbitrary>], iteration_bounds = array<i64: 1, 1, 1>, scalar_prefetch = 0 : i64, scratch_operands = 0 : i64, tpu.core_type = #tpu.core_type<tc>, window_params = [{transform_indices = @transform_0, window_bounds = array<i64: 16, 128>}, {transform_indices = @transform_1, window_bounds = array<i64: 128, 128>}, {transform_indices = @transform_2, window_bounds = array<i64: 16, 128>}]} {
    %c0_i32 = arith.constant 0 : i32
    %0 = arith.cmpi eq, %arg2, %c0_i32 : i32
    %1 = arith.extui %0 : i1 to i32
    %c0_i32_0 = arith.constant 0 : i32
    %2 = arith.cmpi ne, %1, %c0_i32_0 : i32
    scf.if %2 {
      %cst_8 = arith.constant 0.000000e+00 : f32
      %9 = vector.broadcast %cst_8 : f32 to vector<16x128xf32>
      %c0_9 = arith.constant 0 : index
      %c0_10 = arith.constant 0 : index
      %10 = vector.load %arg5[%c0_9, %c0_10] : memref<16x128xf32, #tpu.memory_space<vmem>>, vector<16x128xf32>
      tpu.vector_store %arg5[%c0_9, %c0_10], %9 {strides = array<i32>} : memref<16x128xf32, #tpu.memory_space<vmem>>, vector<16x128xf32>,
    } else {
    }
    %c0 = arith.constant 0 : index
    %c0_1 = arith.constant 0 : index
    %3 = vector.load %arg5[%c0, %c0_1] : memref<16x128xf32, #tpu.memory_space<vmem>>, vector<16x128xf32>
    %c0_2 = arith.constant 0 : index
    %c0_3 = arith.constant 0 : index
    %4 = vector.load %arg3[%c0_2, %c0_3] : memref<16x128xbf16, #tpu.memory_space<vmem>>, vector<16x128xbf16>
    %c0_4 = arith.constant 0 : index
    %c0_5 = arith.constant 0 : index
    %5 = vector.load %arg4[%c0_4, %c0_5] : memref<128x128xbf16, #tpu.memory_space<vmem>>, vector<128x128xbf16>
    %cst = arith.constant dense<0.000000e+00> : vector<16x128xf32>
    %6 = tpu.matmul %4, %5, %cst {dimension_numbers = #tpu.dot_dimension_numbers<[1], [1], [0], [0], [0, 0, 1, 0], [], []>} : vector<16x128xbf16>, vector<128x128xbf16>, vector<16x128xf32> -> vector<16x128xf32>
    %7 = arith.addf %3, %6 : vector<16x128xf32>
    %c0_6 = arith.constant 0 : index
    %c0_7 = arith.constant 0 : index
    %8 = vector.load %arg5[%c0_6, %c0_7] : memref<16x128xf32, #tpu.memory_space<vmem>>, vector<16x128xf32>
    tpu.vector_store %arg5[%c0_6, %c0_7], %7 {strides = array<i32>} : memref<16x128xf32, #tpu.memory_space<vmem>>, vector<16x128xf32>,
    return
  }
  func.func @transform_0(%arg0: i32, %arg1: i32, %arg2: i32) -> (i32, i32) {
    %c0_i32 = arith.constant 0 : i32
    return %arg0, %arg2 : i32, i32
  }
  func.func @transform_1(%arg0: i32, %arg1: i32, %arg2: i32) -> (i32, i32) {
    %c0_i32 = arith.constant 0 : i32
    return %arg1, %arg2 : i32, i32
  }
  func.func @transform_2(%arg0: i32, %arg1: i32, %arg2: i32) -> (i32, i32) {
    %c0_i32 = arith.constant 0 : i32
    return %arg0, %arg1 : i32, i32
  }
}

</mosaic_0001>

<llo_original>
// kernel: _linear_impl.1
$region0: #{_linear_impl.1}
  #allocation0 [shape = 'u32[]', space=smem, size = 0x4, offset = 0x4, fixed_abs, tag = 'smem constant byte address 0x4 - core index']
  #allocation1 [shape = 'u32[144,128]{1,0:T(1,128)}', space=vmem, size = 0x12000, scoped, tag = 'internal scratch']
  %s0 = inlined_call_operand.vmem [shape: bf16[16,128], index: 0, kind: input, shape index: {}]
  %s1 = inlined_call_operand.vmem [shape: bf16[128,128], index: 1, kind: input, shape index: {}]
  %s2 = inlined_call_operand.vmem [shape: f32[16,128], index: 2, kind: output, shape index: {}]
  %s3 = sld [smem:[#allocation0]]
  $region22: #{_linear_impl.1} parent=0
    _
  %s5 = ssub.s32 1, %s3
  %s6 = scalar_select 0, %s5, %s3
  // Predicated region
  $region2: #{_linear_impl.1} parent=0 // pred_check
    _
  $region3: #{_linear_impl.1} parent=0 // pred_check_branch
    %8 = sbr.rel (0) target = $region5
  $region4: #{_linear_impl.1} parent=0 // pred_region
    _
  $region5: #{_linear_impl.1} parent=0 // pred_fallthru
    _
  // Predicated region
  $region6: #{_linear_impl.1} parent=0 // pred_check
    _
  $region7: #{_linear_impl.1} parent=0 // pred_check_branch
    %10 = sbr.rel (0) target = $region9
  $region8: #{_linear_impl.1} parent=0 // pred_region
    _
  $region9: #{_linear_impl.1} parent=0 // pred_fallthru
    _
  %p12 = scmp.eq.s32.totalorder 0, 0
  // Predicated region
  $region10: #{_linear_impl.1} parent=0 // pred_check
    %p13 = pneg %p12
  $region11: #{_linear_impl.1} parent=0 // pred_check_branch
    %15 = sbr.rel (%p13) target = $region13
  $region12: #{_linear_impl.1} parent=0 // pred_region
    %16 = vst [vmem:[%s2] sm:$0xff] 0.0
    %17 = vst [vmem:[%s2 + $0x8] sm:$0xff] 0.0
  $region13: #{_linear_impl.1} parent=0 // pred_fallthru
    _
  %v18 = vld [vmem:[%s2] sm:$0xff]
  %v19 = vld [vmem:[%s2 + $0x8] sm:$0xff]
  %v20 = vld [vmem:[%s0] sm:$0xf]
  %v21 = vld [vmem:[%s0 + $0x4] sm:$0xf]
  %v22 = vld [vmem:[%s1] sm:$0xf]
  %v23 = vld [vmem:[%s1 + $0x4] sm:$0xf]
  %v24 = vld [vmem:[%s1 + $0x8] sm:$0xf]
  %v25 = vld [vmem:[%s1 + $0xc] sm:$0xf]
  %v26 = vld [vmem:[%s1 + $0x10] sm:$0xf]
  %v27 = vld [vmem:[%s1 + $0x14] sm:$0xf]
  %v28 = vld [vmem:[%s1 + $0x18] sm:$0xf]
  %v29 = vld [vmem:[%s1 + $0x1c] sm:$0xf]
  %v30 = vld [vmem:[%s1 + $0x20] sm:$0xf]
  %v31 = vld [vmem:[%s1 + $0x24] sm:$0xf]
  %v32 = vld [vmem:[%s1 + $0x28] sm:$0xf]
  %v33 = vld [vmem:[%s1 + $0x2c] sm:$0xf]
  %v34 = vld [vmem:[%s1 + $0x30] sm:$0xf]
  %v35 = vld [vmem:[%s1 + $0x34] sm:$0xf]
  %v36 = vld [vmem:[%s1 + $0x38] sm:$0xf]
  %v37 = vld [vmem:[%s1 + $0x3c] sm:$0xf]
  %v40 = vunpack.c.l.b16 %v20
  %v41 = vunpack.c.l.b16 %v21
  %v42 = vpack.c.b16 %v41, %v40
  %v60 = vunpack.c.l.b16 %v22
  %v61 = vunpack.c.l.b16 %v23
  %v62 = vunpack.c.l.b16 %v24
  %v63 = vunpack.c.l.b16 %v25
  %v64 = vunpack.c.l.b16 %v26
  %v65 = vunpack.c.l.b16 %v27
  %v66 = vunpack.c.l.b16 %v28
  %v67 = vunpack.c.l.b16 %v29
  %v68 = vunpack.c.l.b16 %v30
  %v69 = vunpack.c.l.b16 %v31
  %v70 = vunpack.c.l.b16 %v32
  %v71 = vunpack.c.l.b16 %v33
  %v72 = vunpack.c.l.b16 %v34
  %v73 = vunpack.c.l.b16 %v35
  %v74 = vunpack.c.l.b16 %v36
  %v75 = vunpack.c.l.b16 %v37
  %v76 = vpack.c.b16 %v61, %v60
  %v77 = vpack.c.b16 %v63, %v62
  %v78 = vpack.c.b16 %v65, %v64
  %v79 = vpack.c.b16 %v67, %v66
  %v80 = vpack.c.b16 %v69, %v68
  %v81 = vpack.c.b16 %v71, %v70
  %v82 = vpack.c.b16 %v73, %v72
  %v83 = vpack.c.b16 %v75, %v74
  %92 = vmatprep.subr.bf16.mxu0 0
  %93 = vmatpush1.bf16.xpose.msra.mxu0 %v83
  %94 = vmatprep.subr.bf16.mxu0 0
  %95 = vmatpush1.bf16.xpose.msra.mxu0 %v82
  %96 = vmatprep.subr.bf16.mxu0 0
  %97 = vmatpush1.bf16.xpose.msra.mxu0 %v81
  %98 = vmatprep.subr.bf16.mxu0 0
  %99 = vmatpush1.bf16.xpose.msra.mxu0 %v80
  %100 = vmatprep.subr.bf16.mxu0 0
  %101 = vmatpush1.bf16.xpose.msra.mxu0 %v79
  %102 = vmatprep.subr.bf16.mxu0 0
  %103 = vmatpush1.bf16.xpose.msra.mxu0 %v78
  %104 = vmatprep.subr.bf16.mxu0 0
  %105 = vmatpush1.bf16.xpose.msra.mxu0 %v77
  %106 = vmatprep.subr.bf16.mxu0 0
  %107 = vmatpush1.bf16.xpose.msra.mxu0 %v76
  %108 = vmatprep.subr.bf16.mxu0 0
  %109 = vmatpush2.bf16.xpose.msra.mxu0 0
  %110 = vmatprep.subr.bf16.mxu0 0
  %111 = vmatpush2.bf16.xpose.msra.mxu0 0
  %112 = vmatprep.subr.bf16.mxu0 0
  %113 = vmatpush2.bf16.xpose.msra.mxu0 0
  %114 = vmatprep.subr.bf16.mxu0 0
  %115 = vmatpush2.bf16.xpose.msra.mxu0 0
  %116 = vmatprep.subr.bf16.mxu0 0
  %117 = vmatpush2.bf16.xpose.msra.mxu0 0
  %118 = vmatprep.subr.bf16.mxu0 0
  %119 = vmatpush2.bf16.xpose.msra.mxu0 0
  %120 = vmatprep.subr.bf16.mxu0 0
  %121 = vmatpush2.bf16.xpose.msra.mxu0 0
  %122 = vmatprep.subr.bf16.mxu0 0
  %123 = vmatpush2.bf16.xpose.msra.mxu0 0
  %124 = vmatprep.mubr.bf16.mxu0 0
  %125 = vmatmul.mubr.bf16.gmra.mxu0 %v42
  %v126 = vpop.f32.mrf.mxu0
  %v127 = vadd.f32 0.0, %v126
  %v128 = vpop.f32.mrf.mxu0
  %v129 = vpop.f32.mrf.mxu0
  %v130 = vadd.f32 0.0, %v129
  %v131 = vpop.f32.mrf.mxu0
  %132 = vdwg.mxu0
  %v133 = vadd.f32 %v18, %v127
  %v134 = vadd.f32 %v19, %v130
  %135 = vst [vmem:[%s2] sm:$0xff] %v133
  %136 = vst [vmem:[%s2 + $0x8] sm:$0xff] %v134
  // Predicated region
  $region14: #{_linear_impl.1} parent=0 // pred_check
    _
  $region15: #{_linear_impl.1} parent=0 // pred_check_branch
    %138 = sbr.rel (0) target = $region17
  $region16: #{_linear_impl.1} parent=0 // pred_region
    _
  $region17: #{_linear_impl.1} parent=0 // pred_fallthru
    _
  // Predicated region
  $region18: #{_linear_impl.1} parent=0 // pred_check
    _
  $region19: #{_linear_impl.1} parent=0 // pred_check_branch
    %140 = sbr.rel (0) target = $region21
  $region20: #{_linear_impl.1} parent=0 // pred_region
    _
  $region21: #{_linear_impl.1} parent=0 // pred_fallthru
    _

</llo_original>
